<compile_context>
chip_gen: v7x
topology: tpu7x:2x2x1
jax: 0.10.0
libtpu: 0.0.40
codegen_flags: <defaults>
</compile_context>

<pallas_src>
import functools

import jax
import jax.numpy as jnp
from jax.experimental import pallas as pl
from jax.experimental.pallas import tpu as pltpu


def _cdiv(a, b):
    return -(-a // b)


def _round_up(x, m):
    return _cdiv(x, m) * m


def _default_num_partials():
    """2 partials only where a second TensorCore can actually use them."""
    try:
        kind = jax.devices()[0].device_kind.lower()
    except Exception:  # pragma: no cover - defensive
        return 1
    if "lite" in kind or "v5e" in kind or "v6" in kind:
        return 1                      # single TensorCore chips
    if "v7" in kind or "v4" in kind or "v5p" in kind or kind.strip().endswith("v5"):
        return 2                      # 2 TCs (v7x) / megacore (v4, v5p)
    return 1


def _ce_label_smooth_kernel(x_ref, t_ref, o_ref, acc_ref, *,
                            epsilon, num_classes, batch_size,
                            tile_rows, inner_steps):
    p = pl.program_id(0)          # partial-sum ("parallel") axis
    s = pl.program_id(1)          # batch-tile accumulation ("arbitrary") axis

    @pl.when(s == 0)
    def _init():
        acc_ref[p, 0] = jnp.float32(0.0)

    x = x_ref[...].astype(jnp.float32)            # (TB, C), cast once per tile
    tb, c = x.shape

    # Numerically stable log-sum-exp pieces (lane-axis reductions -> XLU).
    m = jnp.max(x, axis=1, keepdims=True)                              # (TB, 1)
    lse = jnp.log(jnp.sum(jnp.exp(x - m), axis=1, keepdims=True))      # (TB, 1)

    # Fused smoothed-target weights: q_c = eps/C + (1-eps)*[c == t].
    # Since sum_c q_c == 1:  row_loss = m + lse - sum_c q_c * x_c.
    class_ids = jax.lax.broadcasted_iota(jnp.int32, (1, c), 1)         # (1, C)
    off_w = epsilon / num_classes
    on_w = 1.0 - epsilon + off_w
    coef = jnp.where(class_ids == t_ref[...], on_w, off_w)             # (TB, C)
    weighted = jnp.sum(coef * x, axis=1, keepdims=True)                # (TB, 1)

    row_loss = (m + lse) - weighted                                    # (TB, 1)

    # Mask rows past the true batch (ragged final tile reads garbage; all
    # reductions above are per-row, so masking here is sufficient).
    row0 = (p * inner_steps + s) * tile_rows
    row_ids = row0 + jax.lax.broadcasted_iota(jnp.int32, (tb, 1), 0)
    row_loss = jnp.where(row_ids < batch_size, row_loss, 0.0)

    acc_ref[p, 0] += jnp.sum(row_loss)

    @pl.when(s == inner_steps - 1)
    def _finalize():
        # Scale by 1 / GLOBAL batch; partials are summed outside the kernel.
        o_ref[0, 0] = acc_ref[p, 0] * (1.0 / batch_size)


def cross_entropy_label_smooth(inputs, targets, *, epsilon=0.1,
                               tile_rows=None, num_partials=None,
                               vmem_limit_bytes=None):
    """inputs: (B, C) float logits (f32 or bf16); targets: (B,) int labels.

    Returns the scalar f32 label-smoothed cross-entropy loss, equivalent to
    `(-q * log_softmax(inputs)).mean(0).sum()` with
    q = (1 - eps) * onehot(targets) + eps / C.
    """
    batch, num_classes = inputs.shape
    targets_col = targets.astype(jnp.int32).reshape(batch, 1)

    itemsize = jnp.dtype(inputs.dtype).itemsize
    # Sublane packing multiple for the second-minor dim: 8 (f32), 16 (bf16), 32 (8-bit).
    sub = {4: 8, 2: 16, 1: 32}.get(int(itemsize), 8)

    if tile_rows is None:
        # Size the tile by the f32 working set (~4 MiB), not the raw input tile:
        # peak VMEM ~ 2 x input_buf (double-buffered) + a few (TB, C) f32
        # intermediates, comfortably inside v7x's 64 MiB / v5e's 128 MiB.
        f32_budget = 4 * 1024 * 1024
        rows = f32_budget // max(num_classes * 4, 1)
        rows = max(sub, (rows // sub) * sub)
        tile_rows = min(rows, _round_up(batch, sub))
    tile_rows = max(sub, _round_up(int(tile_rows), sub))

    num_tiles = _cdiv(batch, tile_rows)

    if num_partials is None:
        num_partials = _default_num_partials()
    num_partials = max(1, min(int(num_partials), num_tiles))
    if num_tiles % num_partials != 0:
        # Keep grid product == num_tiles: never a block fully past the array,
        # never an extra partial's worth of wasted DMA.
        num_partials = 1
    inner_steps = num_tiles // num_partials

    if vmem_limit_bytes is None:
        in_tile_bytes = tile_rows * num_classes * itemsize
        f32_tile_bytes = tile_rows * num_classes * 4
        est = 2 * in_tile_bytes + 4 * f32_tile_bytes + (2 << 20)
        vmem_limit_bytes = int(min(48 << 20, max(32 << 20, est)))

    kernel = functools.partial(
        _ce_label_smooth_kernel,
        epsilon=float(epsilon),
        num_classes=int(num_classes),
        batch_size=int(batch),
        tile_rows=int(tile_rows),
        inner_steps=int(inner_steps),
    )

    grid_spec = pltpu.PrefetchScalarGridSpec(
        num_scalar_prefetch=0,
        grid=(num_partials, inner_steps),
        in_specs=[
            # Logits: (TB, C) tile, lane-dense along classes (full C last dim).
            pl.BlockSpec((tile_rows, num_classes),
                         lambda p, s: (p * inner_steps + s, 0)),
            # Labels: (TB, 1) int32 column.
            pl.BlockSpec((tile_rows, 1),
                         lambda p, s: (p * inner_steps + s, 0)),
        ],
        out_specs=pl.BlockSpec((1, 1), lambda p, s: (p, 0),
                               memory_space=pltpu.MemorySpace.SMEM),
        scratch_shapes=[pltpu.SMEM((num_partials, 1), jnp.float32)],
    )

    partials = pl.pallas_call(
        kernel,
        out_shape=jax.ShapeDtypeStruct((num_partials, 1), jnp.float32),
        grid_spec=grid_spec,
        compiler_params=pltpu.CompilerParams(
            dimension_semantics=("parallel", "arbitrary"),
            vmem_limit_bytes=vmem_limit_bytes,
        ),
    )(inputs, targets_col)

    return jnp.sum(partials)


def _reference(logits, labels, epsilon):
    log_probs = jax.nn.log_softmax(logits.astype(jnp.float32), axis=1)
    onehot = jax.nn.one_hot(labels, logits.shape[1], dtype=jnp.float32)
    q = (1.0 - epsilon) * onehot + epsilon / logits.shape[1]
    return jnp.sum(jnp.mean(-q * log_probs, axis=0))


if __name__ == "__main__":
    key = jax.random.PRNGKey(0)
    keys = jax.random.split(key, 6)

    # Primary example (module spec: (batch, num_classes) logits + labels).
    batch, num_classes = 8, 32
    logits = jax.random.normal(keys[0], (batch, num_classes), dtype=jnp.float32)
    labels = jax.random.randint(keys[1], (batch,), 0, num_classes, dtype=jnp.int32)
    loss = cross_entropy_label_smooth(logits, labels, epsilon=0.1)
    jax.block_until_ready(loss)
    ref = _reference(logits, labels, 0.1)
    assert jnp.allclose(loss, ref, atol=1e-5, rtol=1e-5), (loss, ref)

    # Ragged batch + multi-tile grid (exercises the no-pad OOB row mask and
    # the accumulation axis).
    b2, c2 = 13, 160
    logits2 = jax.random.normal(keys[2], (b2, c2), dtype=jnp.float32)
    labels2 = jax.random.randint(keys[3], (b2,), 0, c2, dtype=jnp.int32)
    loss2 = cross_entropy_label_smooth(logits2, labels2, epsilon=0.1, tile_rows=8)
    jax.block_until_ready(loss2)
    ref2 = _reference(logits2, labels2, 0.1)
    assert jnp.allclose(loss2, ref2, atol=1e-5, rtol=1e-5), (loss2, ref2)

    # bf16 inputs, ragged batch: tile_rows rounds up to the bf16 sublane
    # multiple (16); in-kernel f32 cast path.
    b3, c3 = 40, 256
    logits3 = jax.random.normal(keys[4], (b3, c3), dtype=jnp.float32).astype(jnp.bfloat16)
    labels3 = jax.random.randint(keys[5], (b3,), 0, c3, dtype=jnp.int32)
    loss3 = cross_entropy_label_smooth(logits3, labels3, epsilon=0.1, tile_rows=16)
    jax.block_until_ready(loss3)
    ref3 = _reference(logits3, labels3, 0.1)
    assert jnp.allclose(loss3, ref3, atol=1e-3, rtol=1e-3), (loss3, ref3)

    print("KERNEL_OK")
</pallas_src>

<mosaic_0001>
module attributes {stable_mosaic.version = 11 : i64} {
  func.func @_ce_label_smooth_kernel(%arg0: i32, %arg1: i32, %arg2: memref<8x32xf32, #tpu.memory_space<vmem>>, %arg3: memref<8x1xi32, #tpu.memory_space<vmem>>, %arg4: memref<1x1xf32, #tpu.memory_space<smem>>, %arg5: memref<1x1xf32, #tpu.memory_space<smem>>) attributes {dimension_semantics = [#tpu.dimension_semantics<parallel>, #tpu.dimension_semantics<arbitrary>], iteration_bounds = array<i64: 1, 1>, scalar_prefetch = 0 : i64, scratch_operands = 1 : i64, tpu.core_type = #tpu.core_type<tc>, window_params = [{transform_indices = @transform_0, window_bounds = array<i64: 8, 32>}, {transform_indices = @transform_1, window_bounds = array<i64: 8, 1>}, {transform_indices = @transform_2, window_bounds = array<i64: 1, 1>}]} {
    %c0_i32 = arith.constant 0 : i32
    %0 = arith.cmpi eq, %arg1, %c0_i32 : i32
    %1 = arith.extui %0 : i1 to i32
    %c0_i32_0 = arith.constant 0 : i32
    %2 = arith.cmpi ne, %1, %c0_i32_0 : i32
    scf.if %2 {
      %cst_15 = arith.constant 0.000000e+00 : f32
      %47 = arith.index_cast %arg0 : i32 to index
      %c0_16 = arith.constant 0 : index
      %48 = memref.load %arg5[%47, %c0_16] : memref<1x1xf32, #tpu.memory_space<smem>>
      memref.store %cst_15, %arg5[%47, %c0_16] : memref<1x1xf32, #tpu.memory_space<smem>>
    } else {
    }
    %c0 = arith.constant 0 : index
    %c0_1 = arith.constant 0 : index
    %3 = vector.load %arg2[%c0, %c0_1] : memref<8x32xf32, #tpu.memory_space<vmem>>, vector<8x32xf32>
    %cst = arith.constant dense<0xFF800000> : vector<8xf32>
    %4 = vector.multi_reduction <maximumf>, %3, %cst [1] : vector<8x32xf32> to vector<8xf32>
    %5 = vector.shape_cast %4 : vector<8xf32> to vector<8x1xf32>
    %6 = vector.broadcast %5 : vector<8x1xf32> to vector<8x32xf32>
    %7 = arith.subf %3, %6 : vector<8x32xf32>
    %8 = math.exp %7 : vector<8x32xf32>
    %cst_2 = arith.constant dense<0.000000e+00> : vector<8xf32>
    %9 = vector.multi_reduction <add>, %8, %cst_2 [1] : vector<8x32xf32> to vector<8xf32>
    %10 = vector.shape_cast %9 : vector<8xf32> to vector<8x1xf32>
    %11 = math.log %10 : vector<8x1xf32>
    %12 = tpu.iota {dimensions = array<i32: 1>} : vector<1x32xi32>
    %c0_3 = arith.constant 0 : index
    %c0_4 = arith.constant 0 : index
    %13 = vector.load %arg3[%c0_3, %c0_4] : memref<8x1xi32, #tpu.memory_space<vmem>>, vector<8x1xi32>
    %14 = vector.broadcast %12 : vector<1x32xi32> to vector<8x32xi32>
    %15 = vector.broadcast %13 : vector<8x1xi32> to vector<8x32xi32>
    %16 = arith.cmpi eq, %14, %15 : vector<8x32xi32>
    %cst_5 = arith.constant 0.903124988 : f32
    %cst_6 = arith.constant 3.125000e-03 : f32
    %17 = vector.broadcast %cst_5 : f32 to vector<8x32xf32>
    %18 = vector.broadcast %cst_6 : f32 to vector<8x32xf32>
    %19 = arith.select %16, %17, %18 : vector<8x32xi1>, vector<8x32xf32>
    %20 = arith.mulf %19, %3 : vector<8x32xf32>
    %cst_7 = arith.constant dense<0.000000e+00> : vector<8xf32>
    %21 = vector.multi_reduction <add>, %20, %cst_7 [1] : vector<8x32xf32> to vector<8xf32>
    %22 = vector.shape_cast %21 : vector<8xf32> to vector<8x1xf32>
    %23 = arith.addf %5, %11 : vector<8x1xf32>
    %24 = arith.subf %23, %22 : vector<8x1xf32>
    %c1_i32 = arith.constant 1 : i32
    %25 = arith.muli %arg0, %c1_i32 : i32
    %26 = arith.addi %25, %arg1 : i32
    %c8_i32 = arith.constant 8 : i32
    %27 = arith.muli %26, %c8_i32 : i32
    %28 = tpu.iota {dimensions = array<i32: 0>} : vector<8x1xi32>
    %29 = vector.broadcast %27 : i32 to vector<8x1xi32>
    %30 = arith.addi %29, %28 : vector<8x1xi32>
    %c8_i32_8 = arith.constant 8 : i32
    %31 = vector.broadcast %c8_i32_8 : i32 to vector<8x1xi32>
    %32 = arith.cmpi slt, %30, %31 : vector<8x1xi32>
    %cst_9 = arith.constant 0.000000e+00 : f32
    %33 = vector.broadcast %cst_9 : f32 to vector<8x1xf32>
    %34 = arith.select %32, %24, %33 : vector<8x1xi1>, vector<8x1xf32>
    %35 = arith.index_cast %arg0 : i32 to index
    %c0_10 = arith.constant 0 : index
    %36 = memref.load %arg5[%35, %c0_10] : memref<1x1xf32, #tpu.memory_space<smem>>
    %37 = vector.shape_cast %34 : vector<8x1xf32> to vector<1x8x1xf32>
    %cst_11 = arith.constant dense<0.000000e+00> : vector<1xf32>
    %38 = vector.multi_reduction <add>, %37, %cst_11 [1, 2] : vector<1x8x1xf32> to vector<1xf32>
    %39 = vector.shape_cast %38 : vector<1xf32> to vector<1x1x1xf32>
    %40 = vector.extract %39[0, 0, 0] : f32 from vector<1x1x1xf32>
    %41 = arith.addf %36, %40 : f32
    %42 = arith.index_cast %arg0 : i32 to index
    %c0_12 = arith.constant 0 : index
    %43 = memref.load %arg5[%42, %c0_12] : memref<1x1xf32, #tpu.memory_space<smem>>
    memref.store %41, %arg5[%42, %c0_12] : memref<1x1xf32, #tpu.memory_space<smem>>
    %c0_i32_13 = arith.constant 0 : i32
    %44 = arith.cmpi eq, %arg1, %c0_i32_13 : i32
    %45 = arith.extui %44 : i1 to i32
    %c0_i32_14 = arith.constant 0 : i32
    %46 = arith.cmpi ne, %45, %c0_i32_14 : i32
    scf.if %46 {
      %47 = arith.index_cast %arg0 : i32 to index
      %c0_15 = arith.constant 0 : index
      %48 = memref.load %arg5[%47, %c0_15] : memref<1x1xf32, #tpu.memory_space<smem>>
      %cst_16 = arith.constant 1.250000e-01 : f32
      %49 = arith.mulf %48, %cst_16 : f32
      %c0_17 = arith.constant 0 : index
      %c0_18 = arith.constant 0 : index
      %50 = memref.load %arg4[%c0_17, %c0_18] : memref<1x1xf32, #tpu.memory_space<smem>>
      memref.store %49, %arg4[%c0_17, %c0_18] : memref<1x1xf32, #tpu.memory_space<smem>>
    } else {
    }
    return
  }
  func.func @transform_0(%arg0: i32, %arg1: i32) -> (i32, i32) {
    %c1_i32 = arith.constant 1 : i32
    %0 = arith.muli %arg0, %c1_i32 : i32
    %1 = arith.addi %0, %arg1 : i32
    %c0_i32 = arith.constant 0 : i32
    %c0_i32_0 = arith.constant 0 : i32
    return %1, %c0_i32 : i32, i32
  }
  func.func @transform_1(%arg0: i32, %arg1: i32) -> (i32, i32) {
    %c1_i32 = arith.constant 1 : i32
    %0 = arith.muli %arg0, %c1_i32 : i32
    %1 = arith.addi %0, %arg1 : i32
    %c0_i32 = arith.constant 0 : i32
    %c0_i32_0 = arith.constant 0 : i32
    return %1, %c0_i32 : i32, i32
  }
  func.func @transform_2(%arg0: i32, %arg1: i32) -> (i32, i32) {
    %c0_i32 = arith.constant 0 : i32
    %c0_i32_0 = arith.constant 0 : i32
    return %arg0, %c0_i32 : i32, i32
  }
}

</mosaic_0001>

<llo_original>
// kernel: tpu_custom_call.1
$region0: #{tpu_custom_call.1}
  #allocation0 [shape = 'u32[]', space=smem, size = 0x4, offset = 0x4, fixed_abs, tag = 'smem constant byte address 0x4 - core index']
  #allocation1 [shape = 'u32[144,128]{1,0:T(1,128)}', space=vmem, size = 0x12000, scoped, tag = 'internal scratch']
  #allocation2 [shape = 'f32[1,1]{1,0:T(1,128)}', space=smem, size = 0x200, scoped, tag = 'scratch operand']
  %s0 = inlined_call_operand.vmem [shape: f32[8,32], index: 0, kind: input, shape index: {}]
  %s1 = inlined_call_operand.vmem [shape: s32[8,1], index: 1, kind: input, shape index: {}]
  %s2 = inlined_call_operand.hbm [shape: f32[1,1], index: 2, kind: output, shape index: {}]
  %s3 = sld [smem:[#allocation0]]
  $region26: #{tpu_custom_call.1} parent=0
    _
  %s5 = ssub.s32 1, %s3
  %s6 = scalar_select 0, %s5, %s3
  $region1: #{tpu_custom_call.1} parent=0
    #allocation3 [shape = 'u8[512]{0}', space=smem, size = 0x200, scoped, tag = 'output window, operand 0, single buffered']
    #allocation4 [shape = 's32[1]{0}', space=sflag, size = 0x4, scoped, tag = 'scoped memory for tpu_custom_call.1']
    %7 = vsyncpa [#allocation4], 0
    // Predicated region
    $region2: #{tpu_custom_call.1} parent=1 // pred_check
      _
    $region3: #{tpu_custom_call.1} parent=1 // pred_check_branch
      %9 = sbr.rel (0) target = $region5
    $region4: #{tpu_custom_call.1} parent=1 // pred_region
      %s10 = sadd.s32 0, 0
      %p11 = scmp.lt.s32.totalorder %s10, 0
      %s12 = scalar_select %p11, %s10, 0
      %s13 = smul.addr %s12, 8
      %s14 = scalar_lea.vmem %s0, %s13
      %s15 = sadd.s32 0, 0
    $region5: #{tpu_custom_call.1} parent=1 // pred_fallthru
      _
    // Predicated region
    $region6: #{tpu_custom_call.1} parent=1 // pred_check
      _
    $region7: #{tpu_custom_call.1} parent=1 // pred_check_branch
      %17 = sbr.rel (0) target = $region9
    $region8: #{tpu_custom_call.1} parent=1 // pred_region
      %s18 = sadd.s32 0, 0
      %p19 = scmp.lt.s32.totalorder %s18, 0
      %s20 = scalar_select %p19, %s18, 0
      %s21 = smul.addr %s20, 8
      %s22 = scalar_lea.vmem %s1, %s21
      %s23 = sadd.s32 0, 0
    $region9: #{tpu_custom_call.1} parent=1 // pred_fallthru
      _
    %s24 = sadd.s32 0, 0
    %p25 = scmp.lt.s32.totalorder %s24, 0
    %s26 = scalar_select %p25, %s24, 0
    %s27 = smul.addr %s26, 8
    %s28 = scalar_lea.vmem %s0, %s27
    %s29 = sadd.s32 0, 0
    %p30 = scmp.lt.s32.totalorder %s29, 0
    %s31 = scalar_select %p30, %s29, 0
    %s32 = smul.addr %s31, 8
    %s33 = scalar_lea.vmem %s1, %s32
    %s34 = sadd.s32 0, 0
    %p35 = scmp.lt.s32.totalorder %s34, 0
    %s36 = scalar_select %p35, %s34, 0
    %s37 = smul.addr %s36, 8
    %s38 = scalar_lea.vmem %s0, %s37
    %s39 = sadd.s32 0, 0
    %s40 = sadd.s32 0, 0
    %p41 = scmp.lt.s32.totalorder %s40, 0
    %s42 = scalar_select %p41, %s40, 0
    %s43 = smul.addr %s42, 8
    %s44 = scalar_lea.vmem %s1, %s43
    %s45 = sadd.s32 0, 0
    %p46 = scmp.eq.s32.totalorder 0, 0
    // Predicated region
    $region10: #{tpu_custom_call.1} parent=1 // pred_check
      %p47 = pneg %p46
    $region11: #{tpu_custom_call.1} parent=1 // pred_check_branch
      %49 = sbr.rel (%p47) target = $region13
    $region12: #{tpu_custom_call.1} parent=1 // pred_region
      %s50 = smul.u32 0, 128
      %s51 = scalar_lea.smem [#allocation2], %s50
      %52 = sst [smem:[%s51]] 0.0
    $region13: #{tpu_custom_call.1} parent=1 // pred_fallthru
      _
    %v53 = vld [vmem:[%s38] sm:$0xff]
    %vm54 = vcmask 261120
    %v55 = vsel %vm54, %v53, -inf
    %56 = vmax.xlane.f32.xlu0 %v55
    %v57 = vpop.xlane.xlu0 %56
    %v58 = vsub.f32 %v53, %v57
    %v59 = vmul.f32 %v58, 1.442695
    %v60 = vpow.pop %v59
    %v61 = vsel %vm54, %v60, 0.0
    %62 = vadd.xlane.f32.xlu0 %v61
    %v63 = vpop.xlane.xlu0 %62
    %v64 = vlog2.pop %v63
    %v65 = vmul.f32 %v64, 0.6931472
    %v66 = vlaneseq
    %v67 = vand.u32 %v66, 127
    %v68 = vld [vmem:[%s44] sm:$0xff]
    %69 = vset.pattern.permute.xlu0 0
    %70 = vperm.xlu0 %69, %v68
    %v71 = vpop.permute.xlu0 %70
    %vm72 = vcmp.eq.s32.totalorder %v67, %v71
    %v73 = vsel %vm72, 0.903125, 0.003125
    %v74 = vmul.f32 %v73, %v53
    %v75 = vsel %vm54, %v74, 0.0
    %76 = vadd.xlane.f32.xlu0 %v75
    %v77 = vpop.xlane.xlu0 %76
    %v78 = vadd.f32 %v57, %v65
    %v79 = vsub.f32 %v78, %v77
    %s80 = sadd.s32 0, 0
    %s81 = smul.u32 %s80, 8
    %v82 = vlaneseq
    %v83 = vshrl.u32 %v82, 7
    %v84 = vstv %s81
    %v85 = vadd.s32 %v84, %v83
    %vm86 = vcmp.lt.s32.totalorder %v85, 8
    %v87 = vsel %vm86, %v79, 0.0
    %s88 = smul.u32 0, 128
    %s89 = sld [smem:[#allocation2 + %s88]]
    %vm90 = vcmask 7168
    %v91 = vsel %vm90, %v87, 0.0
    %92 = vadd.xlane.f32.xlu0 %v91
    %v93 = vpop.xlane.xlu0 %92
    %v94 = vrot.slane %v93, 4
    %v95 = vadd.f32 %v93, %v94
    %v96 = vrot.slane %v95, 2
    %v97 = vadd.f32 %v95, %v96
    %v98 = vrot.slane %v97, 1
    %v99 = vadd.f32 %v97, %v98
    %s100 = vtos %v99
    %s101 = sadd.f32 %s89, %s100
    %s102 = scalar_lea.smem [#allocation2], %s88
    %103 = sst [smem:[%s102]] %s101
    // Predicated region
    $region14: #{tpu_custom_call.1} parent=1 // pred_check
      %p104 = pneg %p46
    $region15: #{tpu_custom_call.1} parent=1 // pred_check_branch
      %106 = sbr.rel (%p104) target = $region17
    $region16: #{tpu_custom_call.1} parent=1 // pred_region
      %s107 = sld [smem:[#allocation2 + %s88]]
      %s108 = smul.f32 %s107, 0.125
      %s109 = scalar_lea.smem [#allocation3], 0
      %110 = sst [smem:[%s109]] %s108
    $region17: #{tpu_custom_call.1} parent=1 // pred_fallthru
      _
    // Predicated region
    $region18: #{tpu_custom_call.1} parent=1 // pred_check
      _
    $region19: #{tpu_custom_call.1} parent=1 // pred_check_branch
      %112 = sbr.rel (0) target = $region21
    $region20: #{tpu_custom_call.1} parent=1 // pred_region
      %s114 = ssub.s32 16, 16
      %115 = vsyncadd [#allocation4], %s114
      %118 = dma.smem_to_hbm [#allocation3], 16, %s2, [#allocation4]
    $region21: #{tpu_custom_call.1} parent=1 // pred_fallthru
      _
    // Predicated region
    $region22: #{tpu_custom_call.1} parent=1 // pred_check
      _
    $region23: #{tpu_custom_call.1} parent=1 // pred_check_branch
      %120 = sbr.rel (0) target = $region25
    $region24: #{tpu_custom_call.1} parent=1 // pred_region
      %121 = dma.done [#allocation4], 16
    $region25: #{tpu_custom_call.1} parent=1 // pred_fallthru
      _
    %122 = sfence
    %123 = vsyncpa [#allocation4], 1

</llo_original>
